<compile_context>
chip_gen: v6e
topology: v6e:2x2x1
jax: 0.10.0
libtpu: 0.0.40
codegen_flags: <defaults>
</compile_context>

<pallas_src>
import jax
import jax.numpy as jnp
from jax.experimental import pallas as pl
from jax.experimental.pallas import tpu as pltpu


# ----------------------------- kernel ---------------------------------------


def make_mlp_kernel(n_layers):
    """Fused kernel: n_layers of (matmul + per-feature add), tanh on all but last."""

    def kernel(*refs):
        x_ref = refs[0]
        o_ref = refs[-1]
        wb = refs[1:-1]                      # alternating (W, b) refs
        h = x_ref[...]                       # (tb, in_dim) f32
        for i in range(n_layers):
            w_ref = wb[2 * i]
            b_ref = wb[2 * i + 1]
            # MXU operands may be bf16; accumulate in f32, add f32 bias.
            acc = jnp.dot(h.astype(w_ref.dtype), w_ref[...],
                          preferred_element_type=jnp.float32) + b_ref[...]
            if i < n_layers - 1:
                h = jnp.tanh(acc)            # f32 tanh (EUP), v5e-safe
            else:
                h = acc
        o_ref[...] = h.astype(o_ref.dtype)

    return kernel


# ----------------------------- wrapper ---------------------------------------


def _choose_tb(batch):
    """Pick a batch tile: >=2 parallel grid steps (v7x has 2 TCs), rows multiple
    of 8 (full sublanes), capped at 512 rows/tile (sweep 256-1024 on real sizes)."""
    if batch <= 8:
        return max(int(batch), 1)
    half = (batch // 2) // 8 * 8
    return int(min(512, max(8, half)))


def mlp_forward(x, kernel_params, output_size, *, tb=None):
    """x: (B, input_size) f32.  kernel_params: flat tuple (W1,b1,...,Wn,bn) with
    BN folded in, W as (in, out), last W/b zero-padded to a multiple of 128 cols."""
    B, in_dim = x.shape
    n_layers = len(kernel_params) // 2
    padded_out = kernel_params[-1].shape[1]

    if tb is None:
        tb = _choose_tb(B)

    # Pad the batch so every tile is full (no silently dropped trailing rows).
    n_tiles = pl.cdiv(B, tb)
    Bp = n_tiles * tb
    if Bp != B:
        x = jnp.pad(x, ((0, Bp - B), (0, 0)))

    def full_spec(a):
        nd = a.ndim
        return pl.BlockSpec(a.shape, lambda i, _nd=nd: (0,) * _nd)

    in_specs = [pl.BlockSpec((tb, in_dim), lambda i: (i, 0))]
    in_specs += [full_spec(p) for p in kernel_params]
    out_specs = pl.BlockSpec((tb, padded_out), lambda i: (i, 0))

    # NOTE: for large hidden sizes, set pltpu.CompilerParams(vmem_limit_bytes=...)
    # and re-derive tb against the 64 MiB v7x VMEM budget; at these toy shapes the
    # defaults are ample.
    out = pl.pallas_call(
        make_mlp_kernel(n_layers),
        out_shape=jax.ShapeDtypeStruct((Bp, padded_out), jnp.float32),
        grid=(n_tiles,),
        in_specs=in_specs,
        out_specs=out_specs,
        compiler_params=pltpu.CompilerParams(dimension_semantics=("parallel",)),
    )(x, *kernel_params)

    return out[:B, :output_size]


# ----------------------------- params ----------------------------------------


def init_torch_mlp(key, input_size, hidden_sizes, output_size):
    """PyTorch-style params: Linear W (out,in)/b with default uniform init, and
    non-trivial BatchNorm1d eval-mode stats on every hidden layer."""
    dims = [input_size] + list(hidden_sizes) + [output_size]
    layers = []
    keys = jax.random.split(key, len(dims) - 1)
    for i, k in enumerate(keys):
        fan_in, fan_out = dims[i], dims[i + 1]
        kw, kb, kg, kbe, km, kv = jax.random.split(k, 6)
        bound = 1.0 / (fan_in ** 0.5)
        layer = {
            "W": jax.random.uniform(kw, (fan_out, fan_in), jnp.float32, -bound, bound),
            "b": jax.random.uniform(kb, (fan_out,), jnp.float32, -bound, bound),
        }
        if i < len(dims) - 2:  # hidden layers carry BatchNorm1d
            layer["gamma"] = 1.0 + 0.1 * jax.random.normal(kg, (fan_out,), jnp.float32)
            layer["beta"] = 0.1 * jax.random.normal(kbe, (fan_out,), jnp.float32)
            layer["mean"] = 0.1 * jax.random.normal(km, (fan_out,), jnp.float32)
            layer["var"] = jnp.abs(1.0 + 0.1 * jax.random.normal(kv, (fan_out,), jnp.float32))
        layers.append(layer)
    return layers


def fold_params(torch_params, *, eps=1e-5, lane_pad=128, weight_dtype=jnp.float32):
    """Fold eval-mode BN into Linear, transpose W to (in,out), pad the final layer's
    output columns with zeros to a multiple of `lane_pad` for lane-dense stores."""
    ops = []
    last = len(torch_params) - 1
    for i, layer in enumerate(torch_params):
        W = layer["W"].T                      # (in, out)
        b = layer["b"]
        if "gamma" in layer:
            scale = layer["gamma"] / jnp.sqrt(layer["var"] + eps)
            shift = layer["beta"] - layer["mean"] * scale
            W = W * scale[None, :]
            b = b * scale + shift
        if i == last:
            out = W.shape[1]
            padded = ((out + lane_pad - 1) // lane_pad) * lane_pad
            W = jnp.pad(W, ((0, 0), (0, padded - out)))
            b = jnp.pad(b, (0, padded - out))
        ops.append(W.astype(weight_dtype))               # MXU operand (may be bf16)
        ops.append(b.reshape(1, -1).astype(jnp.float32))  # f32 bias/shift
    return tuple(ops)


# ----------------------------- reference --------------------------------------


def mlp_reference(x, torch_params, eps=1e-5):
    """Pure-JAX eval-mode reference mirroring the PyTorch Sequential exactly."""
    h = x
    for layer in torch_params:
        h = h @ layer["W"].T + layer["b"]
        if "gamma" in layer:
            h = (h - layer["mean"]) / jnp.sqrt(layer["var"] + eps) \
                * layer["gamma"] + layer["beta"]
            h = jnp.tanh(h)
            # Dropout(0.5) is identity in eval mode.
    return h


# ----------------------------- demo -------------------------------------------


if __name__ == "__main__":
    input_size = 16
    hidden_sizes = [32, 64]
    output_size = 4
    batch = 16

    key = jax.random.PRNGKey(0)
    kx, kp = jax.random.split(key)
    x = jax.random.normal(kx, (batch, input_size), jnp.float32)
    torch_params = init_torch_mlp(kp, input_size, hidden_sizes, output_size)

    ref = mlp_reference(x, torch_params)

    # f32 weights (exact eval-mode parity).
    params_f32 = fold_params(torch_params, weight_dtype=jnp.float32)
    out = jax.block_until_ready(mlp_forward(x, params_f32, output_size))
    assert out.shape == (batch, output_size)
    assert jnp.allclose(out, ref, atol=1e-5, rtol=1e-5), "f32 kernel mismatch vs reference"

    # bf16 MXU operands (f32 accumulation + f32 tanh), as recommended for v6e/v7x.
    params_bf16 = fold_params(torch_params, weight_dtype=jnp.bfloat16)
    out_bf16 = jax.block_until_ready(mlp_forward(x, params_bf16, output_size))
    assert out_bf16.shape == (batch, output_size)
    assert bool(jnp.all(jnp.isfinite(out_bf16)))
    assert jnp.allclose(out_bf16, ref, atol=5e-2, rtol=5e-2), "bf16 kernel mismatch vs reference"

    print("KERNEL_OK")
</pallas_src>

<mosaic_0001>
module attributes {stable_mosaic.version = 11 : i64} {
  func.func @kernel(%arg0: i32, %arg1: memref<8x16xf32, #tpu.memory_space<vmem>>, %arg2: memref<16x32xf32, #tpu.memory_space<vmem>>, %arg3: memref<1x32xf32, #tpu.memory_space<vmem>>, %arg4: memref<32x64xf32, #tpu.memory_space<vmem>>, %arg5: memref<1x64xf32, #tpu.memory_space<vmem>>, %arg6: memref<64x128xf32, #tpu.memory_space<vmem>>, %arg7: memref<1x128xf32, #tpu.memory_space<vmem>>, %arg8: memref<8x128xf32, #tpu.memory_space<vmem>>) attributes {dimension_semantics = [#tpu.dimension_semantics<parallel>], iteration_bounds = array<i64: 2>, scalar_prefetch = 0 : i64, scratch_operands = 0 : i64, tpu.core_type = #tpu.core_type<tc>, window_params = [{transform_indices = @transform_0, window_bounds = array<i64: 8, 16>}, {pipeline_mode = #tpu.pipeline_mode<synchronous>, transform_indices = @transform_1, window_bounds = array<i64: 16, 32>}, {pipeline_mode = #tpu.pipeline_mode<synchronous>, transform_indices = @transform_2, window_bounds = array<i64: 1, 32>}, {pipeline_mode = #tpu.pipeline_mode<synchronous>, transform_indices = @transform_3, window_bounds = array<i64: 32, 64>}, {pipeline_mode = #tpu.pipeline_mode<synchronous>, transform_indices = @transform_4, window_bounds = array<i64: 1, 64>}, {pipeline_mode = #tpu.pipeline_mode<synchronous>, transform_indices = @transform_5, window_bounds = array<i64: 64, 128>}, {pipeline_mode = #tpu.pipeline_mode<synchronous>, transform_indices = @transform_6, window_bounds = array<i64: 1, 128>}, {transform_indices = @transform_7, window_bounds = array<i64: 8, 128>}]} {
    %c0 = arith.constant 0 : index
    %c0_0 = arith.constant 0 : index
    %0 = vector.load %arg1[%c0, %c0_0] : memref<8x16xf32, #tpu.memory_space<vmem>>, vector<8x16xf32>
    %c0_1 = arith.constant 0 : index
    %c0_2 = arith.constant 0 : index
    %1 = vector.load %arg2[%c0_1, %c0_2] : memref<16x32xf32, #tpu.memory_space<vmem>>, vector<16x32xf32>
    %cst = arith.constant dense<0.000000e+00> : vector<8x32xf32>
    %2 = tpu.matmul %0, %1, %cst {dimension_numbers = #tpu.dot_dimension_numbers<[1], [0], [0], [1], [0, 0, 1, 1], [], []>} : vector<8x16xf32>, vector<16x32xf32>, vector<8x32xf32> -> vector<8x32xf32>
    %c0_3 = arith.constant 0 : index
    %c0_4 = arith.constant 0 : index
    %3 = vector.load %arg3[%c0_3, %c0_4] : memref<1x32xf32, #tpu.memory_space<vmem>>, vector<1x32xf32>
    %4 = vector.broadcast %3 : vector<1x32xf32> to vector<8x32xf32>
    %5 = arith.addf %2, %4 : vector<8x32xf32>
    %6 = math.tanh %5 : vector<8x32xf32>
    %c0_5 = arith.constant 0 : index
    %c0_6 = arith.constant 0 : index
    %7 = vector.load %arg4[%c0_5, %c0_6] : memref<32x64xf32, #tpu.memory_space<vmem>>, vector<32x64xf32>
    %cst_7 = arith.constant dense<0.000000e+00> : vector<8x64xf32>
    %8 = tpu.matmul %6, %7, %cst_7 {dimension_numbers = #tpu.dot_dimension_numbers<[1], [0], [0], [1], [0, 0, 1, 1], [], []>} : vector<8x32xf32>, vector<32x64xf32>, vector<8x64xf32> -> vector<8x64xf32>
    %c0_8 = arith.constant 0 : index
    %c0_9 = arith.constant 0 : index
    %9 = vector.load %arg5[%c0_8, %c0_9] : memref<1x64xf32, #tpu.memory_space<vmem>>, vector<1x64xf32>
    %10 = vector.broadcast %9 : vector<1x64xf32> to vector<8x64xf32>
    %11 = arith.addf %8, %10 : vector<8x64xf32>
    %12 = math.tanh %11 : vector<8x64xf32>
    %c0_10 = arith.constant 0 : index
    %c0_11 = arith.constant 0 : index
    %13 = vector.load %arg6[%c0_10, %c0_11] : memref<64x128xf32, #tpu.memory_space<vmem>>, vector<64x128xf32>
    %cst_12 = arith.constant dense<0.000000e+00> : vector<8x128xf32>
    %14 = tpu.matmul %12, %13, %cst_12 {dimension_numbers = #tpu.dot_dimension_numbers<[1], [0], [0], [1], [0, 0, 1, 1], [], []>} : vector<8x64xf32>, vector<64x128xf32>, vector<8x128xf32> -> vector<8x128xf32>
    %c0_13 = arith.constant 0 : index
    %c0_14 = arith.constant 0 : index
    %15 = vector.load %arg7[%c0_13, %c0_14] : memref<1x128xf32, #tpu.memory_space<vmem>>, vector<1x128xf32>
    %16 = vector.broadcast %15 : vector<1x128xf32> to vector<8x128xf32>
    %17 = arith.addf %14, %16 : vector<8x128xf32>
    %c0_15 = arith.constant 0 : index
    %c0_16 = arith.constant 0 : index
    %18 = vector.load %arg8[%c0_15, %c0_16] : memref<8x128xf32, #tpu.memory_space<vmem>>, vector<8x128xf32>
    tpu.vector_store %arg8[%c0_15, %c0_16], %17 {strides = array<i32>} : memref<8x128xf32, #tpu.memory_space<vmem>>, vector<8x128xf32>,
    return
  }
  func.func @transform_0(%arg0: i32) -> (i32, i32) {
    %c0_i32 = arith.constant 0 : i32
    %c0_i32_0 = arith.constant 0 : i32
    return %arg0, %c0_i32 : i32, i32
  }
  func.func @transform_1(%arg0: i32) -> (i32, i32) {
    %c0_i32 = arith.constant 0 : i32
    %c0_i32_0 = arith.constant 0 : i32
    %c0_i32_1 = arith.constant 0 : i32
    return %c0_i32, %c0_i32_0 : i32, i32
  }
  func.func @transform_2(%arg0: i32) -> (i32, i32) {
    %c0_i32 = arith.constant 0 : i32
    %c0_i32_0 = arith.constant 0 : i32
    %c0_i32_1 = arith.constant 0 : i32
    return %c0_i32, %c0_i32_0 : i32, i32
  }
  func.func @transform_3(%arg0: i32) -> (i32, i32) {
    %c0_i32 = arith.constant 0 : i32
    %c0_i32_0 = arith.constant 0 : i32
    %c0_i32_1 = arith.constant 0 : i32
    return %c0_i32, %c0_i32_0 : i32, i32
  }
  func.func @transform_4(%arg0: i32) -> (i32, i32) {
    %c0_i32 = arith.constant 0 : i32
    %c0_i32_0 = arith.constant 0 : i32
    %c0_i32_1 = arith.constant 0 : i32
    return %c0_i32, %c0_i32_0 : i32, i32
  }
  func.func @transform_5(%arg0: i32) -> (i32, i32) {
    %c0_i32 = arith.constant 0 : i32
    %c0_i32_0 = arith.constant 0 : i32
    %c0_i32_1 = arith.constant 0 : i32
    return %c0_i32, %c0_i32_0 : i32, i32
  }
  func.func @transform_6(%arg0: i32) -> (i32, i32) {
    %c0_i32 = arith.constant 0 : i32
    %c0_i32_0 = arith.constant 0 : i32
    %c0_i32_1 = arith.constant 0 : i32
    return %c0_i32, %c0_i32_0 : i32, i32
  }
  func.func @transform_7(%arg0: i32) -> (i32, i32) {
    %c0_i32 = arith.constant 0 : i32
    %c0_i32_0 = arith.constant 0 : i32
    return %arg0, %c0_i32 : i32, i32
  }
}

</mosaic_0001>

<llo_original>
// kernel: tpu_custom_call.1
$region0: #{tpu_custom_call.1}
  #allocation0 [shape = 'u32[]', space=smem, size = 0x4, offset = 0x4, fixed_abs, tag = 'smem constant byte address 0x4 - core index']
  #allocation1 [shape = 'u32[144,128]{1,0:T(1,128)}', space=vmem, size = 0x12000, scoped, tag = 'internal scratch']
  %s0 = inlined_call_operand.hbm [shape: f32[16,16], index: 0, kind: input, shape index: {}]
  %s1 = inlined_call_operand.hbm [shape: f32[16,32], index: 1, kind: input, shape index: {}]
  %s2 = inlined_call_operand.vmem [shape: f32[1,32], index: 2, kind: input, shape index: {}]
  %s3 = inlined_call_operand.hbm [shape: f32[32,64], index: 3, kind: input, shape index: {}]
  %s4 = inlined_call_operand.vmem [shape: f32[1,64], index: 4, kind: input, shape index: {}]
  %s5 = inlined_call_operand.hbm [shape: f32[64,128], index: 5, kind: input, shape index: {}]
  %s6 = inlined_call_operand.vmem [shape: f32[1,128], index: 6, kind: input, shape index: {}]
  %s7 = inlined_call_operand.hbm [shape: f32[16,128], index: 7, kind: output, shape index: {}]
  %s8 = sld [smem:[#allocation0]]
  $region77: #{tpu_custom_call.1} parent=0
    _
  %s10 = ssub.s32 1, %s8
  %s11 = scalar_select 0, %s10, %s8
  $region1: #{tpu_custom_call.1} parent=0
    #allocation2 [shape = 'u8[8192]{0}', space=vmem, size = 0x2000, scoped, tag = 'input window, operand 0']
    #allocation3 [shape = 's32[2]{0}', space=sflag, size = 0x8, scoped, tag = 'scoped memory for tpu_custom_call.1']
    #allocation4 [shape = 's32[2]{0}', space=sflag, size = 0x8, scoped, tag = 'scoped memory for tpu_custom_call.1']
    #allocation5 [shape = 'u8[8192]{0}', space=vmem, size = 0x2000, scoped, tag = 'input window, operand 1, single buffered']
    #allocation6 [shape = 's32[1]{0}', space=sflag, size = 0x4, scoped, tag = 'scoped memory for tpu_custom_call.1']
    #allocation7 [shape = 'u8[16384]{0}', space=vmem, size = 0x4000, scoped, tag = 'input window, operand 3, single buffered']
    #allocation8 [shape = 'u8[32768]{0}', space=vmem, size = 0x8000, scoped, tag = 'input window, operand 5, single buffered']
    #allocation9 [shape = 's32[1]{0}', space=sflag, size = 0x4, scoped, tag = 'scoped memory for tpu_custom_call.1']
    #allocation10 [shape = 'u8[8192]{0}', space=vmem, size = 0x2000, scoped, tag = 'output window, operand 0']
    %12 = vsyncpa [#allocation3], 0
    %s13 = scalar_lea.sflag [#allocation3], 1
    %14 = vsyncpa %s13, 0
    %15 = vsyncpa [#allocation6], 0
    %16 = vsyncpa [#allocation9], 0
    %17 = vsyncpa [#allocation4], 0
    %s18 = scalar_lea.sflag [#allocation4], 1
    %19 = vsyncpa %s18, 0
    loop: start=0, step=1, limit=4
    $region2: #{tpu_custom_call.1} parent=1 // loop_pre_header
      _
    $region3: #{tpu_custom_call.1} parent=1 // loop_header
      %s21 = sphi 0, %s25
      %p22 = scmp.ge.s32.totalorder %s21, 4
      %s31 = sphi 0, %s33
      %s34 = sphi 0, %s31
      %s35 = sphi 0, %s34
      %s51 = sphi 0, %s35
      %s55 = sphi 0, %s55
      %s57 = sphi 0, %s55
      %s58 = sphi 0, %s57
      %s72 = sphi 0, %s58
      %s76 = sphi 0, %s76
      %s78 = sphi 0, %s76
      %s79 = sphi 0, %s78
      %s93 = sphi 0, %s79
      %s97 = sphi 0, %s97
      %s99 = sphi 0, %s97
      %s100 = sphi 0, %s99
      %s114 = sphi 0, %s100
      %s118 = sphi 0, %s118
      %s120 = sphi 0, %s118
      %s121 = sphi 0, %s120
      %s135 = sphi 0, %s121
      %s139 = sphi 0, %s139
      %s141 = sphi 0, %s139
      %s142 = sphi 0, %s141
      %s156 = sphi 0, %s142
      %s160 = sphi 0, %s160
      %s162 = sphi 0, %s160
      %s163 = sphi 0, %s162
      %s177 = sphi 0, %s163
      %s183 = sphi 0, %s185
      %s186 = sphi 0, %s183
      %s187 = sphi 0, %s186
      %s203 = sphi 0, %s187
    $region4: #{tpu_custom_call.1} parent=1 // loop_header_branch
      %24 = sbr.rel (%p22) target = $region8
    $region5: #{tpu_custom_call.1} parent=1 // loop_body
      %s26 = ssub.s32 %s21, 1
      %s27 = ssub.s32 %s21, 2
      %s28 = sadd.s32 %s21, 1
      %s29 = ssub.s32 %s21, %s28
      %p30 = scmp.eq.s32.totalorder %s29, 0
      %s32 = sadd.s32 %s31, 1
      %s33 = scalar_select %p30, %s31, %s32
      %p36 = pneg %p30
      %p37 = scmp.eq.s32.totalorder %s21, 1
      %p38 = por %p36, %p37
      %p39 = scmp.ne.s32.totalorder %s31, %s34
      %p40 = scmp.eq.s32.totalorder %s21, 0
      %p41 = por %p39, %p40
      %p42 = scmp.ne.s32.totalorder %s31, %s34
      %p43 = scmp.eq.s32.totalorder %s26, 1
      %p44 = por %p42, %p43
      %p45 = scmp.ne.s32.totalorder %s34, %s35
      %p46 = scmp.eq.s32.totalorder %s26, 0
      %p47 = por %p45, %p46
      %p48 = scmp.ne.s32.totalorder %s34, %s35
      %p49 = scmp.eq.s32.totalorder %s27, 1
      %p50 = por %p48, %p49
      %p52 = scmp.ne.s32.totalorder %s35, %s51
      %p53 = scmp.eq.s32.totalorder %s27, 0
      %p54 = por %p52, %p53
      %s56 = sadd.s32 %s55, 1
      %p59 = scmp.eq.s32.totalorder %s21, 1
      %p60 = scmp.ne.s32.totalorder %s55, %s57
      %p61 = scmp.eq.s32.totalorder %s21, 0
      %p62 = por %p60, %p61
      %p63 = scmp.ne.s32.totalorder %s55, %s57
      %p64 = scmp.eq.s32.totalorder %s26, 1
      %p65 = por %p63, %p64
      %p66 = scmp.ne.s32.totalorder %s57, %s58
      %p67 = scmp.eq.s32.totalorder %s26, 0
      %p68 = por %p66, %p67
      %p69 = scmp.ne.s32.totalorder %s57, %s58
      %p70 = scmp.eq.s32.totalorder %s27, 1
      %p71 = por %p69, %p70
      %p73 = scmp.ne.s32.totalorder %s58, %s72
      %p74 = scmp.eq.s32.totalorder %s27, 0
      %p75 = por %p73, %p74
      %s77 = sadd.s32 %s76, 1
      %p80 = scmp.eq.s32.totalorder %s21, 1
      %p81 = scmp.ne.s32.totalorder %s76, %s78
      %p82 = scmp.eq.s32.totalorder %s21, 0
      %p83 = por %p81, %p82
      %p84 = scmp.ne.s32.totalorder %s76, %s78
      %p85 = scmp.eq.s32.totalorder %s26, 1
      %p86 = por %p84, %p85
      %p87 = scmp.ne.s32.totalorder %s78, %s79
      %p88 = scmp.eq.s32.totalorder %s26, 0
      %p89 = por %p87, %p88
      %p90 = scmp.ne.s32.totalorder %s78, %s79
      %p91 = scmp.eq.s32.totalorder %s27, 1
      %p92 = por %p90, %p91
      %p94 = scmp.ne.s32.totalorder %s79, %s93
      %p95 = scmp.eq.s32.totalorder %s27, 0
      %p96 = por %p94, %p95
      %s98 = sadd.s32 %s97, 1
      %p101 = scmp.eq.s32.totalorder %s21, 1
      %p102 = scmp.ne.s32.totalorder %s97, %s99
      %p103 = scmp.eq.s32.totalorder %s21, 0
      %p104 = por %p102, %p103
      %p105 = scmp.ne.s32.totalorder %s97, %s99
      %p106 = scmp.eq.s32.totalorder %s26, 1
      %p107 = por %p105, %p106
      %p108 = scmp.ne.s32.totalorder %s99, %s100
      %p109 = scmp.eq.s32.totalorder %s26, 0
      %p110 = por %p108, %p109
      %p111 = scmp.ne.s32.totalorder %s99, %s100
      %p112 = scmp.eq.s32.totalorder %s27, 1
      %p113 = por %p111, %p112
      %p115 = scmp.ne.s32.totalorder %s100, %s114
      %p116 = scmp.eq.s32.totalorder %s27, 0
      %p117 = por %p115, %p116
      %s119 = sadd.s32 %s118, 1
      %p122 = scmp.eq.s32.totalorder %s21, 1
      %p123 = scmp.ne.s32.totalorder %s118, %s120
      %p124 = scmp.eq.s32.totalorder %s21, 0
      %p125 = por %p123, %p124
      %p126 = scmp.ne.s32.totalorder %s118, %s120
      %p127 = scmp.eq.s32.totalorder %s26, 1
      %p128 = por %p126, %p127
      %p129 = scmp.ne.s32.totalorder %s120, %s121
      %p130 = scmp.eq.s32.totalorder %s26, 0
      %p131 = por %p129, %p130
      %p132 = scmp.ne.s32.totalorder %s120, %s121
      %p133 = scmp.eq.s32.totalorder %s27, 1
      %p134 = por %p132, %p133
      %p136 = scmp.ne.s32.totalorder %s121, %s135
      %p137 = scmp.eq.s32.totalorder %s27, 0
      %p138 = por %p136, %p137
      %s140 = sadd.s32 %s139, 1
      %p143 = scmp.eq.s32.totalorder %s21, 1
      %p144 = scmp.ne.s32.totalorder %s139, %s141
      %p145 = scmp.eq.s32.totalorder %s21, 0
      %p146 = por %p144, %p145
      %p147 = scmp.ne.s32.totalorder %s139, %s141
      %p148 = scmp.eq.s32.totalorder %s26, 1
      %p149 = por %p147, %p148
      %p150 = scmp.ne.s32.totalorder %s141, %s142
      %p151 = scmp.eq.s32.totalorder %s26, 0
      %p152 = por %p150, %p151
      %p153 = scmp.ne.s32.totalorder %s141, %s142
      %p154 = scmp.eq.s32.totalorder %s27, 1
      %p155 = por %p153, %p154
      %p157 = scmp.ne.s32.totalorder %s142, %s156
      %p158 = scmp.eq.s32.totalorder %s27, 0
      %p159 = por %p157, %p158
      %s161 = sadd.s32 %s160, 1
      %p164 = scmp.eq.s32.totalorder %s21, 1
      %p165 = scmp.ne.s32.totalorder %s160, %s162
      %p166 = scmp.eq.s32.totalorder %s21, 0
      %p167 = por %p165, %p166
      %p168 = scmp.ne.s32.totalorder %s160, %s162
      %p169 = scmp.eq.s32.totalorder %s26, 1
      %p170 = por %p168, %p169
      %p171 = scmp.ne.s32.totalorder %s162, %s163
      %p172 = scmp.eq.s32.totalorder %s26, 0
      %p173 = por %p171, %p172
      %p174 = scmp.ne.s32.totalorder %s162, %s163
      %p175 = scmp.eq.s32.totalorder %s27, 1
      %p176 = por %p174, %p175
      %p178 = scmp.ne.s32.totalorder %s163, %s177
      %p179 = scmp.eq.s32.totalorder %s27, 0
      %p180 = por %p178, %p179
      %s181 = ssub.s32 %s21, %s28
      %p182 = scmp.eq.s32.totalorder %s181, 0
      %s184 = sadd.s32 %s183, 1
      %s185 = scalar_select %p182, %s183, %s184
      %p188 = pneg %p182
      %p189 = scmp.eq.s32.totalorder %s21, 1
      %p190 = por %p188, %p189
      %p191 = scmp.ne.s32.totalorder %s183, %s186
      %p192 = scmp.eq.s32.totalorder %s21, 0
      %p193 = por %p191, %p192
      %p194 = scmp.ne.s32.totalorder %s183, %s186
      %p195 = scmp.eq.s32.totalorder %s26, 1
      %p196 = por %p194, %p195
      %p197 = scmp.ne.s32.totalorder %s186, %s187
      %p198 = scmp.eq.s32.totalorder %s26, 0
      %p199 = por %p197, %p198
      %p200 = scmp.ne.s32.totalorder %s186, %s187
      %p201 = scmp.eq.s32.totalorder %s27, 1
      %p202 = por %p200, %p201
      %p204 = scmp.ne.s32.totalorder %s187, %s203
      %p205 = scmp.eq.s32.totalorder %s27, 0
      %p206 = por %p204, %p205
      %p207 = scmp.le.s32.totalorder 1, %s21
      %p208 = scmp.lt.s32.totalorder %s21, 3
      %p209 = pnand %p207, %p208
      %p210 = pneg %p209
      // Predicated region
      $region9: #{tpu_custom_call.1} parent=5 // pred_check
        _
      $region10: #{tpu_custom_call.1} parent=5 // pred_check_branch
        %212 = sbr.rel (%p209) target = $region12
      $region11: #{tpu_custom_call.1} parent=5 // pred_region
        %s213 = ssub.s32 %s21, 1
        // Predicated region
        $region13: #{tpu_custom_call.1} parent=11 // pred_check
          %p214 = pneg %p68
        $region14: #{tpu_custom_call.1} parent=11 // pred_check_branch
          %216 = sbr.rel (%p214) target = $region16
        $region15: #{tpu_custom_call.1} parent=11 // pred_region
          %s218 = ssub.s32 256, 256
          %219 = vsyncadd [#allocation6], %s218
          %s220 = sshll.u32 [#allocation5], 4
          %s221 = int_to_ptr.vmem [resolvable:$true] %s220
          %226 = dma.hbm_to_vmem [thread:$0]  %s1, 256, %s221, [#allocation6], 128, 128, 8
        $region16: #{tpu_custom_call.1} parent=11 // pred_fallthru
          _
        // Predicated region
        $region17: #{tpu_custom_call.1} parent=11 // pred_check
          %p227 = pneg %p89
        $region18: #{tpu_custom_call.1} parent=11 // pred_check_branch
          %229 = sbr.rel (%p227) target = $region20
        $region19: #{tpu_custom_call.1} parent=11 // pred_region
          _
        $region20: #{tpu_custom_call.1} parent=11 // pred_fallthru
          _
        // Predicated region
        $region21: #{tpu_custom_call.1} parent=11 // pred_check
          %p230 = pneg %p110
        $region22: #{tpu_custom_call.1} parent=11 // pred_check_branch
          %232 = sbr.rel (%p230) target = $region24
        $region23: #{tpu_custom_call.1} parent=11 // pred_region
          %s234 = ssub.s32 512, 512
          %235 = vsyncadd [#allocation6], %s234
          %s236 = sshll.u32 [#allocation7], 4
          %s237 = int_to_ptr.vmem [resolvable:$true] %s236
          %242 = dma.hbm_to_vmem [thread:$0]  %s3, 512, %s237, [#allocation6], 128, 128, 8
        $region24: #{tpu_custom_call.1} parent=11 // pred_fallthru
          _
        // Predicated region
        $region25: #{tpu_custom_call.1} parent=11 // pred_check
          %p243 = pneg %p131
        $region26: #{tpu_custom_call.1} parent=11 // pred_check_branch
          %245 = sbr.rel (%p243) target = $region28
        $region27: #{tpu_custom_call.1} parent=11 // pred_region
          _
        $region28: #{tpu_custom_call.1} parent=11 // pred_fallthru
          _
        // Predicated region
        $region29: #{tpu_custom_call.1} parent=11 // pred_check
          %p246 = pneg %p152
        $region30: #{tpu_custom_call.1} parent=11 // pred_check_branch
          %248 = sbr.rel (%p246) target = $region32
        $region31: #{tpu_custom_call.1} parent=11 // pred_region
          %s250 = ssub.s32 1024, 1024
          %251 = vsyncadd [#allocation9], %s250
          %s252 = sshll.u32 [#allocation8], 4
          %s253 = int_to_ptr.vmem [resolvable:$true] %s252
          %258 = dma.hbm_to_vmem [thread:$0]  %s5, 1024, %s253, [#allocation9], 128, 128, 8
        $region32: #{tpu_custom_call.1} parent=11 // pred_fallthru
          _
        // Predicated region
        $region33: #{tpu_custom_call.1} parent=11 // pred_check
          %p259 = pneg %p173
        $region34: #{tpu_custom_call.1} parent=11 // pred_check_branch
          %261 = sbr.rel (%p259) target = $region36
        $region35: #{tpu_custom_call.1} parent=11 // pred_region
          _
        $region36: #{tpu_custom_call.1} parent=11 // pred_fallthru
          _
      $region12: #{tpu_custom_call.1} parent=5 // pred_fallthru
        _
      %p262 = scmp.lt.s32.totalorder %s21, 2
      // Predicated region
      $region37: #{tpu_custom_call.1} parent=5 // pred_check
        %p263 = pneg %p262
      $region38: #{tpu_custom_call.1} parent=5 // pred_check_branch
        %265 = sbr.rel (%p263) target = $region40
      $region39: #{tpu_custom_call.1} parent=5 // pred_region
        // Predicated region
        $region41: #{tpu_custom_call.1} parent=39 // pred_check
          %p266 = pneg %p41
        $region42: #{tpu_custom_call.1} parent=39 // pred_check_branch
          %268 = sbr.rel (%p266) target = $region44
        $region43: #{tpu_custom_call.1} parent=39 // pred_region
          %s269 = sand.u32 %s31, 1
          %s270 = scalar_lea.sflag [#allocation3], %s269
          %s271 = sand.u32 %s31, 1
          %s272 = smul.addr %s271, 8
          %s273 = scalar_lea.vmem [#allocation2], %s272
          %s275 = ssub.s32 128, 128
          %276 = vsyncadd %s270, %s275
          %s277 = smul.addr %s21, 128
          %s278 = scalar_lea.hbm %s0, %s277
          %s280 = sshll.u32 %s273, 4
          %s281 = int_to_ptr.vmem [resolvable:$true] %s280
          %283 = dma.hbm_to_vmem [thread:$0]  %s278, 128, %s281, %s270
        $region44: #{tpu_custom_call.1} parent=39 // pred_fallthru
          _
      $region40: #{tpu_custom_call.1} parent=5 // pred_fallthru
        _
      %p284 = scmp.le.s32.totalorder 1, %s21
      %p285 = scmp.lt.s32.totalorder %s21, 3
      %p286 = pnand %p284, %p285
      %p287 = pneg %p286
      // Predicated region
      $region45: #{tpu_custom_call.1} parent=5 // pred_check
        _
      $region46: #{tpu_custom_call.1} parent=5 // pred_check_branch
        %289 = sbr.rel (%p286) target = $region48
      $region47: #{tpu_custom_call.1} parent=5 // pred_region
        %s290 = ssub.s32 %s21, 1
        %s291 = sand.u32 %s34, 1
        %s292 = scalar_lea.sflag [#allocation3], %s291
        %s293 = sand.u32 %s34, 1
        %s294 = smul.addr %s293, 8
        %s295 = scalar_lea.vmem [#allocation2], %s294
        // Predicated region
        $region49: #{tpu_custom_call.1} parent=47 // pred_check
          %p296 = pneg %p47
        $region50: #{tpu_custom_call.1} parent=47 // pred_check_branch
          %298 = sbr.rel (%p296) target = $region52
        $region51: #{tpu_custom_call.1} parent=47 // pred_region
          %299 = dma.done %s292, 128
        $region52: #{tpu_custom_call.1} parent=47 // pred_fallthru
          _
        // Predicated region
        $region53: #{tpu_custom_call.1} parent=47 // pred_check
          %p300 = pneg %p68
        $region54: #{tpu_custom_call.1} parent=47 // pred_check_branch
          %302 = sbr.rel (%p300) target = $region56
        $region55: #{tpu_custom_call.1} parent=47 // pred_region
          %303 = dma.done [#allocation6], 256
        $region56: #{tpu_custom_call.1} parent=47 // pred_fallthru
          _
        // Predicated region
        $region57: #{tpu_custom_call.1} parent=47 // pred_check
          %p304 = pneg %p110
        $region58: #{tpu_custom_call.1} parent=47 // pred_check_branch
          %306 = sbr.rel (%p304) target = $region60
        $region59: #{tpu_custom_call.1} parent=47 // pred_region
          %307 = dma.done [#allocation6], 512
        $region60: #{tpu_custom_call.1} parent=47 // pred_fallthru
          _
        // Predicated region
        $region61: #{tpu_custom_call.1} parent=47 // pred_check
          %p308 = pneg %p152
        $region62: #{tpu_custom_call.1} parent=47 // pred_check_branch
          %310 = sbr.rel (%p308) target = $region64
        $region63: #{tpu_custom_call.1} parent=47 // pred_region
          %311 = dma.done [#allocation9], 1024
        $region64: #{tpu_custom_call.1} parent=47 // pred_fallthru
          _
        %s312 = sand.u32 %s34, 1
        %s313 = scalar_lea.sflag [#allocation3], %s312
        %s314 = sand.u32 %s34, 1
        %s315 = smul.addr %s314, 8
        %s316 = scalar_lea.vmem [#allocation2], %s315
        %p317 = pneg %p47
        %p318 = pneg %p44
        %p319 = pneg %p68
        %p320 = pneg %p65
        %p321 = pneg %p89
        %p322 = pneg %p86
        %p323 = pneg %p110
        %p324 = pneg %p107
        %p325 = pneg %p131
        %p326 = pneg %p128
        %p327 = pneg %p152
        %p328 = pneg %p149
        %p329 = pneg %p173
        %p330 = pneg %p170
        %p331 = pneg %p199
        %p332 = pneg %p196
        %s333 = sand.u32 %s186, 1
        %s334 = scalar_lea.sflag [#allocation4], %s333
        %s335 = sand.u32 %s186, 1
        %s336 = smul.addr %s335, 8
        %s337 = scalar_lea.vmem [#allocation10], %s336
        %v338 = vld [vmem:[%s295] sm:$0xff]
        %v339 = vld [vmem:[#allocation5] sm:$0xff]
        %v340 = vld [vmem:[#allocation5 + $0x8] sm:$0xff]
        %v341 = vld [vmem:[%s2] sm:$0x1]
        %v343 = vlaneseq
        %v344 = vshrl.u32 %v343, 7
        %v345 = vsub.s32 0, %v344
        %v346 = vrot.slane %v341, %v345
        %vm348 = vcmask 130048
        %v350 = vsel %vm348, %v338, 0
        %352 = vmatprep.subr.mxu0 0.0
        %353 = vmatpush1.msra.mxu0 0.0
        %354 = vmatprep.subr.mxu0 0.0
        %355 = vmatpush1.msra.mxu0 0.0
        %356 = vmatprep.subr.mxu0 0.0
        %357 = vmatpush1.msra.mxu0 0.0
        %358 = vmatprep.subr.mxu0 0.0
        %359 = vmatpush1.msra.mxu0 0.0
        %360 = vmatprep.subr.mxu0 0.0
        %361 = vmatpush1.msra.mxu0 0.0
        %362 = vmatprep.subr.mxu0 0.0
        %363 = vmatpush1.msra.mxu0 0.0
        %364 = vmatprep.subr.mxu0 0.0
        %365 = vmatpush1.msra.mxu0 0.0
        %366 = vmatprep.subr.mxu0 0.0
        %367 = vmatpush1.msra.mxu0 0.0
        %368 = vmatprep.subr.mxu0 0.0
        %369 = vmatpush1.msra.mxu0 0.0
        %370 = vmatprep.subr.mxu0 0.0
        %371 = vmatpush1.msra.mxu0 0.0
        %372 = vmatprep.subr.mxu0 0.0
        %373 = vmatpush1.msra.mxu0 0.0
        %374 = vmatprep.subr.mxu0 0.0
        %375 = vmatpush1.msra.mxu0 0.0
        %376 = vmatprep.subr.mxu0 0.0
        %377 = vmatpush1.msra.mxu0 0.0
        %378 = vmatprep.subr.mxu0 0.0
        %379 = vmatpush1.msra.mxu0 0.0
        %380 = vmatprep.subr.mxu0 0.0
        %381 = vmatpush1.msra.mxu0 %v340
        %382 = vmatprep.subr.mxu0 0.0
        %383 = vmatpush1.msra.mxu0 %v339
        %384 = vmatprep.subr.mxu0 0.0
        %385 = vmatpush2.msra.mxu0 0.0
        %386 = vmatprep.subr.mxu0 0.0
        %387 = vmatpush2.msra.mxu0 0.0
        %388 = vmatprep.subr.mxu0 0.0
        %389 = vmatpush2.msra.mxu0 0.0
        %390 = vmatprep.subr.mxu0 0.0
        %391 = vmatpush2.msra.mxu0 0.0
        %392 = vmatprep.subr.mxu0 0.0
        %393 = vmatpush2.msra.mxu0 0.0
        %394 = vmatprep.subr.mxu0 0.0
        %395 = vmatpush2.msra.mxu0 0.0
        %396 = vmatprep.subr.mxu0 0.0
        %397 = vmatpush2.msra.mxu0 0.0
        %398 = vmatprep.subr.mxu0 0.0
        %399 = vmatpush2.msra.mxu0 0.0
        %400 = vmatprep.subr.mxu0 0.0
        %401 = vmatpush2.msra.mxu0 0.0
        %402 = vmatprep.subr.mxu0 0.0
        %403 = vmatpush2.msra.mxu0 0.0
        %404 = vmatprep.subr.mxu0 0.0
        %405 = vmatpush2.msra.mxu0 0.0
        %406 = vmatprep.subr.mxu0 0.0
        %407 = vmatpush2.msra.mxu0 0.0
        %408 = vmatprep.subr.mxu0 0.0
        %409 = vmatpush2.msra.mxu0 0.0
        %410 = vmatprep.subr.mxu0 0.0
        %411 = vmatpush2.msra.mxu0 0.0
        %412 = vmatprep.subr.mxu0 0.0
        %413 = vmatpush2.msra.mxu0 0.0
        %414 = vmatprep.subr.mxu0 0.0
        %415 = vmatpush2.msra.mxu0 0.0
        %416 = vmatprep.mubr.f32.mxu0 0.0
        %417 = vmatmul.mubr.f32.gmra.mxu0 %v350
        %v418 = vpop.f32.mrf.mxu0
        %v419 = vadd.f32 %v346, %v418
        %v420 = vpop.f32.mrf.mxu0
        %421 = vdwg.mxu0
        %v422 = vtanh.pop %v419
        %v423 = vld [vmem:[#allocation7] sm:$0xff]
        %v424 = vld [vmem:[#allocation7 + $0x8] sm:$0xff]
        %v425 = vld [vmem:[#allocation7 + $0x10] sm:$0xff]
        %v426 = vld [vmem:[#allocation7 + $0x18] sm:$0xff]
        %v427 = vld [vmem:[%s4] sm:$0x1]
        %v429 = vlaneseq
        %v430 = vshrl.u32 %v429, 7
        %v431 = vsub.s32 0, %v430
        %v432 = vrot.slane %v427, %v431
        %vm434 = vcmask 261120
        %v436 = vsel %vm434, %v422, 0
        %438 = vmatprep.subr.mxu0 0.0
        %439 = vmatpush1.msra.mxu0 0.0
        %440 = vmatprep.subr.mxu0 0.0
        %441 = vmatpush1.msra.mxu0 0.0
        %442 = vmatprep.subr.mxu0 0.0
        %443 = vmatpush1.msra.mxu0 0.0
        %444 = vmatprep.subr.mxu0 0.0
        %445 = vmatpush1.msra.mxu0 0.0
        %446 = vmatprep.subr.mxu0 0.0
        %447 = vmatpush1.msra.mxu0 0.0
        %448 = vmatprep.subr.mxu0 0.0
        %449 = vmatpush1.msra.mxu0 0.0
        %450 = vmatprep.subr.mxu0 0.0
        %451 = vmatpush1.msra.mxu0 0.0
        %452 = vmatprep.subr.mxu0 0.0
        %453 = vmatpush1.msra.mxu0 0.0
        %454 = vmatprep.subr.mxu0 0.0
        %455 = vmatpush1.msra.mxu0 0.0
        %456 = vmatprep.subr.mxu0 0.0
        %457 = vmatpush1.msra.mxu0 0.0
        %458 = vmatprep.subr.mxu0 0.0
        %459 = vmatpush1.msra.mxu0 0.0
        %460 = vmatprep.subr.mxu0 0.0
        %461 = vmatpush1.msra.mxu0 0.0
        %462 = vmatprep.subr.mxu0 0.0
        %463 = vmatpush1.msra.mxu0 %v426
        %464 = vmatprep.subr.mxu0 0.0
        %465 = vmatpush1.msra.mxu0 %v425
        %466 = vmatprep.subr.mxu0 0.0
        %467 = vmatpush1.msra.mxu0 %v424
        %468 = vmatprep.subr.mxu0 0.0
        %469 = vmatpush1.msra.mxu0 %v423
        %470 = vmatprep.subr.mxu0 0.0
        %471 = vmatpush2.msra.mxu0 0.0
        %472 = vmatprep.subr.mxu0 0.0
        %473 = vmatpush2.msra.mxu0 0.0
        %474 = vmatprep.subr.mxu0 0.0
        %475 = vmatpush2.msra.mxu0 0.0
        %476 = vmatprep.subr.mxu0 0.0
        %477 = vmatpush2.msra.mxu0 0.0
        %478 = vmatprep.subr.mxu0 0.0
        %479 = vmatpush2.msra.mxu0 0.0
        %480 = vmatprep.subr.mxu0 0.0
        %481 = vmatpush2.msra.mxu0 0.0
        %482 = vmatprep.subr.mxu0 0.0
        %483 = vmatpush2.msra.mxu0 0.0
        %484 = vmatprep.subr.mxu0 0.0
        %485 = vmatpush2.msra.mxu0 0.0
        %486 = vmatprep.subr.mxu0 0.0
        %487 = vmatpush2.msra.mxu0 0.0
        %488 = vmatprep.subr.mxu0 0.0
        %489 = vmatpush2.msra.mxu0 0.0
        %490 = vmatprep.subr.mxu0 0.0
        %491 = vmatpush2.msra.mxu0 0.0
        %492 = vmatprep.subr.mxu0 0.0
        %493 = vmatpush2.msra.mxu0 0.0
        %494 = vmatprep.subr.mxu0 0.0
        %495 = vmatpush2.msra.mxu0 0.0
        %496 = vmatprep.subr.mxu0 0.0
        %497 = vmatpush2.msra.mxu0 0.0
        %498 = vmatprep.subr.mxu0 0.0
        %499 = vmatpush2.msra.mxu0 0.0
        %500 = vmatprep.subr.mxu0 0.0
        %501 = vmatpush2.msra.mxu0 0.0
        %502 = vmatprep.mubr.f32.mxu0 0.0
        %503 = vmatmul.mubr.f32.gmra.mxu0 %v436
        %v504 = vpop.f32.mrf.mxu0
        %v505 = vadd.f32 %v432, %v504
        %v506 = vpop.f32.mrf.mxu0
        %507 = vdwg.mxu0
        %v508 = vtanh.pop %v505
        %v509 = vld [vmem:[#allocation8] sm:$0xff]
        %v510 = vld [vmem:[#allocation8 + $0x8] sm:$0xff]
        %v511 = vld [vmem:[#allocation8 + $0x10] sm:$0xff]
        %v512 = vld [vmem:[#allocation8 + $0x18] sm:$0xff]
        %v513 = vld [vmem:[#allocation8 + $0x20] sm:$0xff]
        %v514 = vld [vmem:[#allocation8 + $0x28] sm:$0xff]
        %v515 = vld [vmem:[#allocation8 + $0x30] sm:$0xff]
        %v516 = vld [vmem:[#allocation8 + $0x38] sm:$0xff]
        %v517 = vld [vmem:[%s6] sm:$0x1]
        %v519 = vlaneseq
        %v520 = vshrl.u32 %v519, 7
        %v521 = vsub.s32 0, %v520
        %v522 = vrot.slane %v517, %v521
        %vm524 = vcmask 523264
        %v526 = vsel %vm524, %v508, 0
        %528 = vmatprep.subr.mxu0 0.0
        %529 = vmatpush1.msra.mxu0 0.0
        %530 = vmatprep.subr.mxu0 0.0
        %531 = vmatpush1.msra.mxu0 0.0
        %532 = vmatprep.subr.mxu0 0.0
        %533 = vmatpush1.msra.mxu0 0.0
        %534 = vmatprep.subr.mxu0 0.0
        %535 = vmatpush1.msra.mxu0 0.0
        %536 = vmatprep.subr.mxu0 0.0
        %537 = vmatpush1.msra.mxu0 0.0
        %538 = vmatprep.subr.mxu0 0.0
        %539 = vmatpush1.msra.mxu0 0.0
        %540 = vmatprep.subr.mxu0 0.0
        %541 = vmatpush1.msra.mxu0 0.0
        %542 = vmatprep.subr.mxu0 0.0
        %543 = vmatpush1.msra.mxu0 0.0
        %544 = vmatprep.subr.mxu0 0.0
        %545 = vmatpush1.msra.mxu0 %v516
        %546 = vmatprep.subr.mxu0 0.0
        %547 = vmatpush1.msra.mxu0 %v515
        %548 = vmatprep.subr.mxu0 0.0
        %549 = vmatpush1.msra.mxu0 %v514
        %550 = vmatprep.subr.mxu0 0.0
        %551 = vmatpush1.msra.mxu0 %v513
        %552 = vmatprep.subr.mxu0 0.0
        %553 = vmatpush1.msra.mxu0 %v512
        %554 = vmatprep.subr.mxu0 0.0
        %555 = vmatpush1.msra.mxu0 %v511
        %556 = vmatprep.subr.mxu0 0.0
        %557 = vmatpush1.msra.mxu0 %v510
        %558 = vmatprep.subr.mxu0 0.0
        %559 = vmatpush1.msra.mxu0 %v509
        %560 = vmatprep.subr.mxu0 0.0
        %561 = vmatpush2.msra.mxu0 0.0
        %562 = vmatprep.subr.mxu0 0.0
        %563 = vmatpush2.msra.mxu0 0.0
        %564 = vmatprep.subr.mxu0 0.0
        %565 = vmatpush2.msra.mxu0 0.0
        %566 = vmatprep.subr.mxu0 0.0
        %567 = vmatpush2.msra.mxu0 0.0
        %568 = vmatprep.subr.mxu0 0.0
        %569 = vmatpush2.msra.mxu0 0.0
        %570 = vmatprep.subr.mxu0 0.0
        %571 = vmatpush2.msra.mxu0 0.0
        %572 = vmatprep.subr.mxu0 0.0
        %573 = vmatpush2.msra.mxu0 0.0
        %574 = vmatprep.subr.mxu0 0.0
        %575 = vmatpush2.msra.mxu0 0.0
        %576 = vmatprep.subr.mxu0 0.0
        %577 = vmatpush2.msra.mxu0 0.0
        %578 = vmatprep.subr.mxu0 0.0
        %579 = vmatpush2.msra.mxu0 0.0
        %580 = vmatprep.subr.mxu0 0.0
        %581 = vmatpush2.msra.mxu0 0.0
        %582 = vmatprep.subr.mxu0 0.0
        %583 = vmatpush2.msra.mxu0 0.0
        %584 = vmatprep.subr.mxu0 0.0
        %585 = vmatpush2.msra.mxu0 0.0
        %586 = vmatprep.subr.mxu0 0.0
        %587 = vmatpush2.msra.mxu0 0.0
        %588 = vmatprep.subr.mxu0 0.0
        %589 = vmatpush2.msra.mxu0 0.0
        %590 = vmatprep.subr.mxu0 0.0
        %591 = vmatpush2.msra.mxu0 0.0
        %592 = vmatprep.mubr.f32.mxu0 0.0
        %593 = vmatmul.mubr.f32.gmra.mxu0 %v526
        %v594 = vpop.f32.mrf.mxu0
        %v595 = vadd.f32 %v522, %v594
        %v596 = vpop.f32.mrf.mxu0
        %597 = vdwg.mxu0
        %598 = vst [vmem:[%s337] sm:$0xff] %v595
        %s599 = sand.u32 %s186, 1
        %s600 = scalar_lea.sflag [#allocation4], %s599
        %s601 = sand.u32 %s186, 1
        %s602 = smul.addr %s601, 8
        %s603 = scalar_lea.vmem [#allocation10], %s602
        // Predicated region
        $region65: #{tpu_custom_call.1} parent=47 // pred_check
          %p604 = pneg %p196
        $region66: #{tpu_custom_call.1} parent=47 // pred_check_branch
          %606 = sbr.rel (%p604) target = $region68
        $region67: #{tpu_custom_call.1} parent=47 // pred_region
          %s608 = ssub.s32 128, 128
          %609 = vsyncadd %s600, %s608
          %s610 = smul.addr %s26, 128
          %s611 = scalar_lea.hbm %s7, %s610
          %s613 = sshll.u32 %s603, 4
          %s614 = int_to_ptr.vmem [resolvable:$true] %s613
          %616 = dma.vmem_to_hbm [thread:$0]  %s614, 128, %s611, %s600
        $region68: #{tpu_custom_call.1} parent=47 // pred_fallthru
          _
      $region48: #{tpu_custom_call.1} parent=5 // pred_fallthru
        _
      %p617 = scmp.le.s32.totalorder 2, %s21
      // Predicated region
      $region69: #{tpu_custom_call.1} parent=5 // pred_check
        %p618 = pneg %p617
      $region70: #{tpu_custom_call.1} parent=5 // pred_check_branch
        %620 = sbr.rel (%p618) target = $region72
      $region71: #{tpu_custom_call.1} parent=5 // pred_region
        %s621 = ssub.s32 %s21, 2
        // Predicated region
        $region73: #{tpu_custom_call.1} parent=71 // pred_check
          %p622 = pneg %p202
        $region74: #{tpu_custom_call.1} parent=71 // pred_check_branch
          %624 = sbr.rel (%p622) target = $region76
        $region75: #{tpu_custom_call.1} parent=71 // pred_region
          %s625 = sand.u32 %s187, 1
          %s626 = scalar_lea.sflag [#allocation4], %s625
          %s627 = sand.u32 %s187, 1
          %s628 = smul.addr %s627, 8
          %s629 = scalar_lea.vmem [#allocation10], %s628
          %630 = dma.done %s626, 128
        $region76: #{tpu_custom_call.1} parent=71 // pred_fallthru
          _
      $region72: #{tpu_custom_call.1} parent=5 // pred_fallthru
        _
    $region6: #{tpu_custom_call.1} parent=1 // loop_footer
      %s25 = sadd.s32 1, %s21
    $region7: #{tpu_custom_call.1} parent=1 // loop_footer_branch
      %20 = sbr.rel target = $region3
    $region8: #{tpu_custom_call.1} parent=1 // loop_exit
      _
    %631 = vsyncpa [#allocation3], 1
    %s632 = scalar_lea.sflag [#allocation3], 1
    %633 = vsyncpa %s632, 1
    %634 = vsyncpa [#allocation6], 1
    %635 = vsyncpa [#allocation9], 1
    %636 = vsyncpa [#allocation4], 1
    %s637 = scalar_lea.sflag [#allocation4], 1
    %638 = vsyncpa %s637, 1

</llo_original>
